<compile_context>
chip_gen: v5e
topology: v5e:2x2
jax: 0.10.0
libtpu: 0.0.40
codegen_flags: <defaults>
</compile_context>

<pallas_src>
import functools

import jax
import jax.numpy as jnp
from jax.experimental import pallas as pl
from jax.experimental.pallas import tpu as pltpu

D_ENCODER = 32           # config.params['d_encoder'] (synthetic)
EXPANSION_FACTOR = 4
D_EXPAND = D_ENCODER * EXPANSION_FACTOR
LN_EPS = 1e-5

# TODO(synk): Dropout(p=config.p_drop) is identity in eval/inference mode;
# training-mode stochastic dropout is intentionally not implemented here.


# --------------------------------------------------------------------------
# Device / VMEM introspection (all guarded; safe fallbacks everywhere).
# --------------------------------------------------------------------------
def _device_kind():
    try:
        return jax.devices()[0].device_kind.lower()
    except Exception:
        return ""


def _on_tpu():
    try:
        return jax.devices()[0].platform == "tpu"
    except Exception:
        return False


def _tensorcores_per_chip():
    """v7x has 2 TensorCores per chip; v5e/v6e have 1."""
    kind = _device_kind().replace(" ", "")
    if ("v7" in kind) or ("tpu7" in kind) or ("7x" in kind):
        return 2
    return 1


def _vmem_budget_and_limit():
    """Returns (tile-sizing budget, explicit scoped-vmem limit) in bytes."""
    cap = None
    try:
        info = pltpu.get_tpu_info()
        for name in ("vmem_capacity_bytes", "vmem_bytes", "vmem_size_bytes"):
            v = getattr(info, name, None)
            if isinstance(v, int) and v > 0:
                cap = v
                break
    except Exception:
        cap = None
    if cap is None:
        cap = 64 << 20        # conservative: v7x physical (v5e/v6e have 128 MiB)
    budget = min(cap // 2, 64 << 20)                    # used to size the tile
    limit = min(cap - (8 << 20), budget + (24 << 20))   # handed to Mosaic
    return int(budget), int(limit)


def _block_diag(w, p):
    """(a, b) -> (p*a, p*b) block-diagonal replication of w."""
    if p == 1:
        return w
    a, b = w.shape
    eye = jnp.eye(p, dtype=w.dtype)
    return (eye[:, None, :, None] * w[None, :, None, :]).reshape(p * a, p * b)


# --------------------------------------------------------------------------
# Kernel
# --------------------------------------------------------------------------
def _ffn_kernel(*refs, packed, mm_dtype, eps):
    """One row-tile of tokens; all weights resident in VMEM.

    packed=False: x_ref is (TM, D)    one token per row.
    packed=True : x_ref is (TR, P*D)  P tokens per 128-lane row (lane dense);
                  weights are block-diagonal so no in-kernel relayout needed.
    """
    if packed:
        x_ref, s_ref, w1_ref, b1_ref, w2_ref, b2_ref, o_ref = refs
    else:
        x_ref, w1_ref, b1_ref, w2_ref, b2_ref, o_ref = refs

    x = x_ref[...].astype(jnp.float32)

    # LayerNorm statistics (centered two-pass form: no cancellation hazard).
    if packed:
        # Per-token (per D-lane segment) means via a block-diagonal averaging
        # matmul: stays lane-dense, lands on the MXU.  Operands in mm_dtype
        # (bf16 on TPU; 1/D exact in bf16) -> single native MXU pass instead
        # of multi-pass f32 emulation; accumulation stays f32.
        s = s_ref[...]
        mean = jnp.dot(x.astype(mm_dtype), s,
                       preferred_element_type=jnp.float32)
        xc = x - mean
        var = jnp.dot((xc * xc).astype(mm_dtype), s,
                      preferred_element_type=jnp.float32)
    else:
        mean = jnp.mean(x, axis=-1, keepdims=True)
        xc = x - mean
        var = jnp.mean(xc * xc, axis=-1, keepdims=True)
    xn = xc * jax.lax.rsqrt(var + eps)   # LN affine folded into W1/b1

    # Linear(D -> 4D) + SiLU (sigmoid stays on the EUP slot).
    h = jnp.dot(xn.astype(mm_dtype), w1_ref[...],
                preferred_element_type=jnp.float32) + b1_ref[...]
    h = h * jax.nn.sigmoid(h)

    # Linear(4D -> D) + residual (residual uses the raw, un-normalized x).
    y = jnp.dot(h.astype(mm_dtype), w2_ref[...],
                preferred_element_type=jnp.float32) + b2_ref[...]
    o_ref[...] = (x + y).astype(o_ref.dtype)


# --------------------------------------------------------------------------
# Wrapper
# --------------------------------------------------------------------------
@functools.partial(jax.jit, static_argnames=(
    "tile_tokens", "use_bf16", "lane_pack", "vmem_budget", "vmem_limit",
    "num_cores"))
def _ffn_forward(x, gamma, beta, w1, b1, w2, b2, *, tile_tokens, use_bf16,
                 lane_pack, vmem_budget, vmem_limit, num_cores):
    B, S, D = x.shape
    E = w1.shape[1]
    N = B * S
    out_dtype = x.dtype
    f32 = jnp.float32
    mm_dtype = jnp.bfloat16 if use_bf16 else f32
    mm_bytes = 2 if use_bf16 else 4
    io_bytes = jnp.dtype(out_dtype).itemsize

    # Fold the LayerNorm affine into Linear1 (exact):
    #   (xn*g + b) @ W1 + b1 == xn @ (diag(g) @ W1) + (b @ W1 + b1)
    w1f = w1.astype(f32) * gamma.astype(f32)[:, None]
    b1f = b1.astype(f32) + beta.astype(f32) @ w1.astype(f32)

    # Lane-dense packing: P = 128 // D tokens side by side so the x / out
    # block last dim is 128 -> unmasked vst instead of masked vst.msk.
    packed = bool(lane_pack) and D < 128 and (128 % D == 0)
    P = (128 // D) if packed else 1
    Dp, Ep = P * D, P * E

    # ---------------------- Tile sizing -----------------------------------
    # Packed-row count must be a multiple of the sublane granule.
    sublanes = {4: 8, 2: 16, 1: 32}.get(io_bytes, 8)
    granule = sublanes * P                               # in tokens

    # VMEM-derived cap: double-buffered in/out activation blocks + a generous
    # estimate of in-kernel f32 intermediates per packed row + resident
    # (double-buffered) weights + fixed headroom.
    row_bytes = (2 * Dp * io_bytes) * 2 + 6 * Dp * 4 + 3 * Ep * 4
    fixed_bytes = 2 * ((Dp * Dp * mm_bytes if packed else 0)
                       + Dp * Ep * mm_bytes + Ep * 4
                       + Ep * Dp * mm_bytes + Dp * 4) + (3 << 20)
    max_rows = max(1, (vmem_budget - fixed_bytes) // row_bytes)
    cap_vmem = max_rows * P

    # Don't exceed the (granule-padded) problem size.
    cap_n = pl.cdiv(N, granule) * granule

    tile_req = min(int(tile_tokens), cap_vmem, cap_n)
    if num_cores > 1:
        # v7x (2 TCs): keep >= 4 grid steps when possible so each TensorCore
        # gets >= 2 steps and can still pipeline DMA under compute.
        cap_core = max(granule, (N // (2 * num_cores)) // granule * granule)
        tile_req = min(tile_req, cap_core)
    tile_m = max(granule, (tile_req // granule) * granule)
    Np = pl.cdiv(N, tile_m) * tile_m           # padded token count (zero rows are safe)

    # ---------------------- Operand layout --------------------------------
    x2d = x.reshape(N, D)
    if Np != N:
        x2d = jnp.pad(x2d, ((0, Np - N), (0, 0)))
    xk = x2d.reshape(Np // P, Dp)              # contiguous reshape: free in HBM

    w1k = _block_diag(w1f, P).astype(mm_dtype)
    w2k = _block_diag(w2.astype(f32), P).astype(mm_dtype)
    b1k = jnp.tile(b1f, P).reshape(1, Ep)
    b2k = jnp.tile(b2.astype(f32), P).reshape(1, Dp)

    TR = tile_m // P                           # packed rows per tile
    grid = (Np // tile_m,)

    # Constant index_maps: Pallas does not re-DMA a block whose index is
    # unchanged from the previous step -> weights are fetched exactly once.
    # (Kept default-double-buffered; the extra copy is < 1 MiB total here.)
    const = lambda i: (0, 0)
    in_specs = [pl.BlockSpec((TR, Dp), lambda i: (i, 0))]
    operands = [xk]
    if packed:
        s_mat = _block_diag(jnp.full((D, D), 1.0 / D, dtype=f32), P)
        in_specs.append(pl.BlockSpec((Dp, Dp), const))
        operands.append(s_mat.astype(mm_dtype))   # 1/32 is exact in bf16
    in_specs += [pl.BlockSpec((Dp, Ep), const), pl.BlockSpec((1, Ep), const),
                 pl.BlockSpec((Ep, Dp), const), pl.BlockSpec((1, Dp), const)]
    operands += [w1k, b1k, w2k, b2k]

    out2d = pl.pallas_call(
        functools.partial(_ffn_kernel, packed=packed, mm_dtype=mm_dtype,
                          eps=LN_EPS),
        out_shape=jax.ShapeDtypeStruct((Np // P, Dp), out_dtype),
        grid_spec=pltpu.PrefetchScalarGridSpec(
            num_scalar_prefetch=0,
            grid=grid,
            in_specs=in_specs,
            out_specs=pl.BlockSpec((TR, Dp), lambda i: (i, 0)),
        ),
        compiler_params=pltpu.CompilerParams(
            dimension_semantics=("parallel",),
            vmem_limit_bytes=vmem_limit),
    )(*operands)

    return out2d.reshape(Np, D)[:N].reshape(B, S, D)


def feed_forward_module(x, gamma, beta, w1, b1, w2, b2, *, tile_tokens=16384,
                        mxu_bf16=None, lane_pack=None):
    """x: (B, S, D) -> (B, S, D) = x + FFN(LayerNorm(x))."""
    on_tpu = _on_tpu()
    if mxu_bf16 is None:
        # All relevant TPU generations (v5e/v6e/v7x) have bf16-native MXUs;
        # f32 MXU inputs are multi-pass emulation, so bf16 is the default.
        mxu_bf16 = on_tpu
    if lane_pack is None:
        # Lane-dense packing is a win on every generation (unmasked vst,
        # full 128-lane vregs); the extra block-diagonal MACs are cheap bf16.
        lane_pack = on_tpu
    vmem_budget, vmem_limit = _vmem_budget_and_limit()
    return _ffn_forward(x, gamma, beta, w1, b1, w2, b2,
                        tile_tokens=int(tile_tokens),
                        use_bf16=bool(mxu_bf16), lane_pack=bool(lane_pack),
                        vmem_budget=vmem_budget, vmem_limit=vmem_limit,
                        num_cores=_tensorcores_per_chip())


def _reference(x, gamma, beta, w1, b1, w2, b2):
    xn = (x - x.mean(-1, keepdims=True)) / jnp.sqrt(
        x.var(-1, keepdims=True) + LN_EPS)
    xn = xn * gamma + beta
    h = xn @ w1 + b1
    h = h * jax.nn.sigmoid(h)
    y = h @ w2 + b2
    return x + y


if __name__ == "__main__":
    key = jax.random.PRNGKey(0)
    k_x, k_g, k_be, k_w1, k_b1, k_w2, k_b2, k_xl = jax.random.split(key, 8)

    B, S, D, E = 2, 8, D_ENCODER, D_EXPAND

    x = jax.random.normal(k_x, (B, S, D), dtype=jnp.float32)
    gamma = 1.0 + 0.1 * jax.random.normal(k_g, (D,), dtype=jnp.float32)
    beta = 0.1 * jax.random.normal(k_be, (D,), dtype=jnp.float32)
    w1 = jax.random.uniform(k_w1, (D, E), dtype=jnp.float32,
                            minval=-1.0, maxval=1.0) / jnp.sqrt(D)
    b1 = jax.random.uniform(k_b1, (E,), dtype=jnp.float32,
                            minval=-1.0, maxval=1.0) / jnp.sqrt(D)
    w2 = jax.random.uniform(k_w2, (E, D), dtype=jnp.float32,
                            minval=-1.0, maxval=1.0) / jnp.sqrt(E)
    b2 = jax.random.uniform(k_b2, (D,), dtype=jnp.float32,
                            minval=-1.0, maxval=1.0) / jnp.sqrt(E)

    ref = _reference(x, gamma, beta, w1, b1, w2, b2)

    # 1) Exact-precision path (f32 MXU inputs, row-major blocks): tight check.
    out_f32 = jax.block_until_ready(
        feed_forward_module(x, gamma, beta, w1, b1, w2, b2,
                            mxu_bf16=False, lane_pack=False))
    assert out_f32.shape == x.shape
    assert jnp.allclose(out_f32, ref, atol=1e-4, rtol=1e-4), "f32 path mismatch"

    # 2) Lane-packed path (bf16 MXU inputs, f32 accumulation): looser check.
    out_packed = jax.block_until_ready(
        feed_forward_module(x, gamma, beta, w1, b1, w2, b2,
                            mxu_bf16=True, lane_pack=True))
    assert jnp.allclose(out_packed, ref, atol=1e-1, rtol=1e-1), \
        "packed/bf16 path mismatch"

    # 3) Auto (device-dependent) configuration at a larger, non-tile-aligned
    #    token count to exercise the padding / tiling / VMEM-cap logic.
    Bl, Sl = 3, 1731                       # N = 5193 tokens (not tile-aligned)
    xl = jax.random.normal(k_xl, (Bl, Sl, D), dtype=jnp.float32)
    refl = _reference(xl, gamma, beta, w1, b1, w2, b2)
    outl = jax.block_until_ready(
        feed_forward_module(xl, gamma, beta, w1, b1, w2, b2))
    tol = 1e-1 if _on_tpu() else 1e-4
    assert outl.shape == xl.shape
    assert jnp.allclose(outl, refl, atol=tol, rtol=tol), "auto path mismatch"

    print("KERNEL_OK")
</pallas_src>

<mosaic_0001>
module attributes {stable_mosaic.version = 11 : i64} {
  func.func @_ffn_kernel(%arg0: i32, %arg1: memref<16x32xf32, #tpu.memory_space<vmem>>, %arg2: memref<32x128xf32, #tpu.memory_space<vmem>>, %arg3: memref<1x128xf32, #tpu.memory_space<vmem>>, %arg4: memref<128x32xf32, #tpu.memory_space<vmem>>, %arg5: memref<1x32xf32, #tpu.memory_space<vmem>>, %arg6: memref<16x32xf32, #tpu.memory_space<vmem>>) attributes {dimension_semantics = [#tpu.dimension_semantics<parallel>], iteration_bounds = array<i64: 1>, scalar_prefetch = 0 : i64, scratch_operands = 0 : i64, tpu.core_type = #tpu.core_type<tc>, window_params = [{transform_indices = @transform_0, window_bounds = array<i64: 16, 32>}, {pipeline_mode = #tpu.pipeline_mode<synchronous>, transform_indices = @transform_1, window_bounds = array<i64: 32, 128>}, {pipeline_mode = #tpu.pipeline_mode<synchronous>, transform_indices = @transform_2, window_bounds = array<i64: 1, 128>}, {pipeline_mode = #tpu.pipeline_mode<synchronous>, transform_indices = @transform_3, window_bounds = array<i64: 128, 32>}, {pipeline_mode = #tpu.pipeline_mode<synchronous>, transform_indices = @transform_4, window_bounds = array<i64: 1, 32>}, {transform_indices = @transform_5, window_bounds = array<i64: 16, 32>}]} {
    %c0 = arith.constant 0 : index
    %c0_0 = arith.constant 0 : index
    %0 = vector.load %arg1[%c0, %c0_0] : memref<16x32xf32, #tpu.memory_space<vmem>>, vector<16x32xf32>
    %cst = arith.constant dense<0.000000e+00> : vector<16xf32>
    %1 = vector.multi_reduction <add>, %0, %cst [1] : vector<16x32xf32> to vector<16xf32>
    %2 = vector.shape_cast %1 : vector<16xf32> to vector<16x1xf32>
    %cst_1 = arith.constant 3.200000e+01 : f32
    %3 = vector.broadcast %cst_1 : f32 to vector<16x1xf32>
    %4 = arith.divf %2, %3 : vector<16x1xf32>
    %5 = vector.broadcast %4 : vector<16x1xf32> to vector<16x32xf32>
    %6 = arith.subf %0, %5 : vector<16x32xf32>
    %7 = arith.mulf %6, %6 : vector<16x32xf32>
    %cst_2 = arith.constant dense<0.000000e+00> : vector<16xf32>
    %8 = vector.multi_reduction <add>, %7, %cst_2 [1] : vector<16x32xf32> to vector<16xf32>
    %9 = vector.shape_cast %8 : vector<16xf32> to vector<16x1xf32>
    %cst_3 = arith.constant 3.200000e+01 : f32
    %10 = vector.broadcast %cst_3 : f32 to vector<16x1xf32>
    %11 = arith.divf %9, %10 : vector<16x1xf32>
    %cst_4 = arith.constant 9.99999974E-6 : f32
    %12 = vector.broadcast %cst_4 : f32 to vector<16x1xf32>
    %13 = arith.addf %11, %12 : vector<16x1xf32>
    %14 = math.rsqrt %13 : vector<16x1xf32>
    %15 = vector.broadcast %14 : vector<16x1xf32> to vector<16x32xf32>
    %16 = arith.mulf %6, %15 : vector<16x32xf32>
    %c0_5 = arith.constant 0 : index
    %c0_6 = arith.constant 0 : index
    %17 = vector.load %arg2[%c0_5, %c0_6] : memref<32x128xf32, #tpu.memory_space<vmem>>, vector<32x128xf32>
    %cst_7 = arith.constant dense<0.000000e+00> : vector<16x128xf32>
    %18 = tpu.matmul %16, %17, %cst_7 {dimension_numbers = #tpu.dot_dimension_numbers<[1], [0], [0], [1], [0, 0, 1, 1], [], []>} : vector<16x32xf32>, vector<32x128xf32>, vector<16x128xf32> -> vector<16x128xf32>
    %c0_8 = arith.constant 0 : index
    %c0_9 = arith.constant 0 : index
    %19 = vector.load %arg3[%c0_8, %c0_9] : memref<1x128xf32, #tpu.memory_space<vmem>>, vector<1x128xf32>
    %20 = vector.broadcast %19 : vector<1x128xf32> to vector<16x128xf32>
    %21 = arith.addf %18, %20 : vector<16x128xf32>
    %22 = arith.negf %21 : vector<16x128xf32>
    %23 = math.exp %22 : vector<16x128xf32>
    %cst_10 = arith.constant 1.000000e+00 : f32
    %24 = vector.broadcast %cst_10 : f32 to vector<16x128xf32>
    %25 = arith.addf %24, %23 : vector<16x128xf32>
    %26 = arith.divf %24, %25 : vector<16x128xf32>
    %27 = arith.mulf %21, %26 : vector<16x128xf32>
    %c0_11 = arith.constant 0 : index
    %c0_12 = arith.constant 0 : index
    %28 = vector.load %arg4[%c0_11, %c0_12] : memref<128x32xf32, #tpu.memory_space<vmem>>, vector<128x32xf32>
    %cst_13 = arith.constant dense<0.000000e+00> : vector<16x32xf32>
    %29 = tpu.matmul %27, %28, %cst_13 {dimension_numbers = #tpu.dot_dimension_numbers<[1], [0], [0], [1], [0, 0, 1, 1], [], []>} : vector<16x128xf32>, vector<128x32xf32>, vector<16x32xf32> -> vector<16x32xf32>
    %c0_14 = arith.constant 0 : index
    %c0_15 = arith.constant 0 : index
    %30 = vector.load %arg5[%c0_14, %c0_15] : memref<1x32xf32, #tpu.memory_space<vmem>>, vector<1x32xf32>
    %31 = vector.broadcast %30 : vector<1x32xf32> to vector<16x32xf32>
    %32 = arith.addf %29, %31 : vector<16x32xf32>
    %33 = arith.addf %0, %32 : vector<16x32xf32>
    %c0_16 = arith.constant 0 : index
    %c0_17 = arith.constant 0 : index
    %34 = vector.load %arg6[%c0_16, %c0_17] : memref<16x32xf32, #tpu.memory_space<vmem>>, vector<16x32xf32>
    tpu.vector_store %arg6[%c0_16, %c0_17], %33 {strides = array<i32>} : memref<16x32xf32, #tpu.memory_space<vmem>>, vector<16x32xf32>,
    return
  }
  func.func @transform_0(%arg0: i32) -> (i32, i32) {
    %c0_i32 = arith.constant 0 : i32
    %c0_i32_0 = arith.constant 0 : i32
    return %arg0, %c0_i32 : i32, i32
  }
  func.func @transform_1(%arg0: i32) -> (i32, i32) {
    %c0_i32 = arith.constant 0 : i32
    %c0_i32_0 = arith.constant 0 : i32
    %c0_i32_1 = arith.constant 0 : i32
    return %c0_i32, %c0_i32_0 : i32, i32
  }
  func.func @transform_2(%arg0: i32) -> (i32, i32) {
    %c0_i32 = arith.constant 0 : i32
    %c0_i32_0 = arith.constant 0 : i32
    %c0_i32_1 = arith.constant 0 : i32
    return %c0_i32, %c0_i32_0 : i32, i32
  }
  func.func @transform_3(%arg0: i32) -> (i32, i32) {
    %c0_i32 = arith.constant 0 : i32
    %c0_i32_0 = arith.constant 0 : i32
    %c0_i32_1 = arith.constant 0 : i32
    return %c0_i32, %c0_i32_0 : i32, i32
  }
  func.func @transform_4(%arg0: i32) -> (i32, i32) {
    %c0_i32 = arith.constant 0 : i32
    %c0_i32_0 = arith.constant 0 : i32
    %c0_i32_1 = arith.constant 0 : i32
    return %c0_i32, %c0_i32_0 : i32, i32
  }
  func.func @transform_5(%arg0: i32) -> (i32, i32) {
    %c0_i32 = arith.constant 0 : i32
    %c0_i32_0 = arith.constant 0 : i32
    return %arg0, %c0_i32 : i32, i32
  }
}

</mosaic_0001>

<llo_original>
// kernel: _ffn_forward.1
$region0: #{_ffn_forward.1}
  #allocation0 [shape = 'u32[]', space=smem, size = 0x4, offset = 0x4, fixed_abs, tag = 'smem constant byte address 0x4 - core index']
  #allocation1 [shape = 'u32[72,128]{1,0:T(1,128)}', space=vmem, size = 0x9000, scoped, tag = 'internal scratch']
  %s0 = inlined_call_operand.vmem [shape: f32[16,32], index: 0, kind: input, shape index: {}]
  %s1 = inlined_call_operand.vmem [shape: f32[32,128], index: 1, kind: input, shape index: {}]
  %s2 = inlined_call_operand.vmem [shape: f32[1,128], index: 2, kind: input, shape index: {}]
  %s3 = inlined_call_operand.vmem [shape: f32[128,32], index: 3, kind: input, shape index: {}]
  %s4 = inlined_call_operand.vmem [shape: f32[1,32], index: 4, kind: input, shape index: {}]
  %s5 = inlined_call_operand.hbm [shape: f32[16,32], index: 5, kind: output, shape index: {}]
  %s6 = sld [smem:[#allocation0]]
  $region30: #{_ffn_forward.1} parent=0
    _
  %s8 = ssub.s32 1, %s6
  %s9 = scalar_select 0, %s8, %s6
  $region1: #{_ffn_forward.1} parent=0
    #allocation2 [shape = 'u8[8192]{0}', space=vmem, size = 0x2000, scoped, tag = 'output window, operand 0, single buffered']
    #allocation3 [shape = 's32[1]{0}', space=sflag, size = 0x4, scoped, tag = 'scoped memory for _ffn_forward.1']
    %10 = vsyncpa [#allocation3], 0
    // Predicated region
    $region2: #{_ffn_forward.1} parent=1 // pred_check
      _
    $region3: #{_ffn_forward.1} parent=1 // pred_check_branch
      %12 = sbr.rel (0) target = $region5
    $region4: #{_ffn_forward.1} parent=1 // pred_region
      _
    $region5: #{_ffn_forward.1} parent=1 // pred_fallthru
      _
    // Predicated region
    $region6: #{_ffn_forward.1} parent=1 // pred_check
      _
    $region7: #{_ffn_forward.1} parent=1 // pred_check_branch
      %14 = sbr.rel (0) target = $region9
    $region8: #{_ffn_forward.1} parent=1 // pred_region
      _
    $region9: #{_ffn_forward.1} parent=1 // pred_fallthru
      _
    // Predicated region
    $region10: #{_ffn_forward.1} parent=1 // pred_check
      _
    $region11: #{_ffn_forward.1} parent=1 // pred_check_branch
      %16 = sbr.rel (0) target = $region13
    $region12: #{_ffn_forward.1} parent=1 // pred_region
      _
    $region13: #{_ffn_forward.1} parent=1 // pred_fallthru
      _
    // Predicated region
    $region14: #{_ffn_forward.1} parent=1 // pred_check
      _
    $region15: #{_ffn_forward.1} parent=1 // pred_check_branch
      %18 = sbr.rel (0) target = $region17
    $region16: #{_ffn_forward.1} parent=1 // pred_region
      _
    $region17: #{_ffn_forward.1} parent=1 // pred_fallthru
      _
    // Predicated region
    $region18: #{_ffn_forward.1} parent=1 // pred_check
      _
    $region19: #{_ffn_forward.1} parent=1 // pred_check_branch
      %20 = sbr.rel (0) target = $region21
    $region20: #{_ffn_forward.1} parent=1 // pred_region
      _
    $region21: #{_ffn_forward.1} parent=1 // pred_fallthru
      _
    %v21 = vld [vmem:[%s0] sm:$0xff]
    %v22 = vld [vmem:[%s0 + $0x8] sm:$0xff]
    %vm23 = vcmask 261120
    %v24 = vsel %vm23, %v21, 0.0
    %25 = vadd.xlane.f32.xlu0 %v24
    %v26 = vpop.xlane.xlu0 %25
    %v27 = vsel %vm23, %v22, 0.0
    %28 = vadd.xlane.f32.xlu0 %v27
    %v29 = vpop.xlane.xlu0 %28
    %v30 = vrcp.pop 32.0
    %v31 = vmul.f32 32.0, %v30
    %v32 = vsub.f32 1.0, %v31
    %v33 = vmul.f32 %v30, %v32
    %v34 = vadd.f32 %v30, %v33
    %vm35 = vweird.f32 %v30
    %v36 = vsel %vm35, %v30, %v34
    %v37 = vmul.f32 %v26, %v36
    %v38 = vmul.f32 %v29, %v36
    %v39 = vsub.f32 %v21, %v37
    %v40 = vsub.f32 %v22, %v38
    %v41 = vmul.f32 %v39, %v39
    %v42 = vmul.f32 %v40, %v40
    %v43 = vsel %vm23, %v41, 0.0
    %44 = vadd.xlane.f32.xlu0 %v43
    %v45 = vpop.xlane.xlu0 %44
    %v46 = vsel %vm23, %v42, 0.0
    %47 = vadd.xlane.f32.xlu0 %v46
    %v48 = vpop.xlane.xlu0 %47
    %v49 = vmul.f32 %v45, %v36
    %v50 = vmul.f32 %v48, %v36
    %v51 = vadd.f32 %v49, 1e-05
    %v52 = vadd.f32 %v50, 1e-05
    %v53 = vrsqrt.pop %v51
    %v54 = vmul.f32 %v53, %v51
    %v55 = vmul.f32 %v54, %v53
    %v56 = vmul.f32 0.5, %v55
    %v57 = vsub.f32 1.5, %v56
    %v58 = vmul.f32 %v53, %v57
    %vm59 = vweird.f32 %v51
    %vm60 = vweird.f32 %v53
    %vm61 = vmor %vm59, %vm60
    %v62 = vsel %vm61, %v53, %v58
    %v63 = vrsqrt.pop %v52
    %v64 = vmul.f32 %v63, %v52
    %v65 = vmul.f32 %v64, %v63
    %v66 = vmul.f32 0.5, %v65
    %v67 = vsub.f32 1.5, %v66
    %v68 = vmul.f32 %v63, %v67
    %vm69 = vweird.f32 %v52
    %vm70 = vweird.f32 %v63
    %vm71 = vmor %vm69, %vm70
    %v72 = vsel %vm71, %v63, %v68
    %v73 = vmul.f32 %v39, %v62
    %v74 = vmul.f32 %v40, %v72
    %v75 = vld [vmem:[%s1] sm:$0xff]
    %v76 = vld [vmem:[%s1 + $0x8] sm:$0xff]
    %v77 = vld [vmem:[%s1 + $0x10] sm:$0xff]
    %v78 = vld [vmem:[%s1 + $0x18] sm:$0xff]
    %v79 = vld [vmem:[%s2] sm:$0x1]
    %v81 = vperm.slane %v79, 0
    %v84 = vsel %vm23, %v73, 0
    %v87 = vsel %vm23, %v74, 0
    %89 = vmatpush.msra.mxu0 0.0
    %90 = vmatpush.msra.mxu0 0.0
    %91 = vmatpush.msra.mxu0 0.0
    %92 = vmatpush.msra.mxu0 0.0
    %93 = vmatpush.msra.mxu0 0.0
    %94 = vmatpush.msra.mxu0 0.0
    %95 = vmatpush.msra.mxu0 0.0
    %96 = vmatpush.msra.mxu0 0.0
    %97 = vmatpush.msra.mxu0 0.0
    %98 = vmatpush.msra.mxu0 0.0
    %99 = vmatpush.msra.mxu0 0.0
    %100 = vmatpush.msra.mxu0 0.0
    %101 = vmatpush.msra.mxu0 %v78
    %102 = vmatpush.msra.mxu0 %v77
    %103 = vmatpush.msra.mxu0 %v76
    %104 = vmatpush.msra.mxu0 %v75
    %105 = vmatmul.f32.gmra.mxu0 %v84
    %v106 = vpop.f32.mrf.mxu0
    %v107 = vadd.f32 %v81, %v106
    %108 = vmatmul.f32.gmra.mxu0 %v87
    %v109 = vpop.f32.mrf.mxu0
    %v110 = vadd.f32 %v81, %v109
    %111 = vdwg.mxu0
    %v112 = vxor.u32 %v107, 2147483648
    %v113 = vxor.u32 %v110, 2147483648
    %v114 = vmul.f32 %v112, 1.442695
    %v115 = vpow.pop %v114
    %v116 = vmul.f32 %v113, 1.442695
    %v117 = vpow.pop %v116
    %v118 = vadd.f32 %v115, 1.0
    %v119 = vadd.f32 %v117, 1.0
    %v120 = vrcp.pop %v118
    %v121 = vmul.f32 %v118, %v120
    %v122 = vsub.f32 1.0, %v121
    %v123 = vmul.f32 %v120, %v122
    %v124 = vadd.f32 %v120, %v123
    %vm125 = vweird.f32 %v118
    %vm126 = vweird.f32 %v120
    %vm127 = vmor %vm125, %vm126
    %v128 = vsel %vm127, %v120, %v124
    %v129 = vand.u32 2147483647, %v118
    %vm130 = vcmp.eq.f32.partialorder %v129, 8.507059e+37
    %v131 = vand.u32 %v118, 2147483648
    %v132 = vor.u32 1.1754944e-38, %v131
    %v133 = vsel %vm130, %v132, %v128
    %v134 = vmul.f32 1.0, %v133
    %v135 = vrcp.pop %v119
    %v136 = vmul.f32 %v119, %v135
    %v137 = vsub.f32 1.0, %v136
    %v138 = vmul.f32 %v135, %v137
    %v139 = vadd.f32 %v135, %v138
    %vm140 = vweird.f32 %v119
    %vm141 = vweird.f32 %v135
    %vm142 = vmor %vm140, %vm141
    %v143 = vsel %vm142, %v135, %v139
    %v144 = vand.u32 2147483647, %v119
    %vm145 = vcmp.eq.f32.partialorder %v144, 8.507059e+37
    %v146 = vand.u32 %v119, 2147483648
    %v147 = vor.u32 1.1754944e-38, %v146
    %v148 = vsel %vm145, %v147, %v143
    %v149 = vmul.f32 1.0, %v148
    %v150 = vmul.f32 %v107, %v134
    %v151 = vmul.f32 %v110, %v149
    %v152 = vld [vmem:[%s3] sm:$0xff]
    %v153 = vld [vmem:[%s3 + $0x8] sm:$0xff]
    %v154 = vld [vmem:[%s3 + $0x10] sm:$0xff]
    %v155 = vld [vmem:[%s3 + $0x18] sm:$0xff]
    %v156 = vld [vmem:[%s3 + $0x20] sm:$0xff]
    %v157 = vld [vmem:[%s3 + $0x28] sm:$0xff]
    %v158 = vld [vmem:[%s3 + $0x30] sm:$0xff]
    %v159 = vld [vmem:[%s3 + $0x38] sm:$0xff]
    %v160 = vld [vmem:[%s3 + $0x40] sm:$0xff]
    %v161 = vld [vmem:[%s3 + $0x48] sm:$0xff]
    %v162 = vld [vmem:[%s3 + $0x50] sm:$0xff]
    %v163 = vld [vmem:[%s3 + $0x58] sm:$0xff]
    %v164 = vld [vmem:[%s3 + $0x60] sm:$0xff]
    %v165 = vld [vmem:[%s3 + $0x68] sm:$0xff]
    %v166 = vld [vmem:[%s3 + $0x70] sm:$0xff]
    %v167 = vld [vmem:[%s3 + $0x78] sm:$0xff]
    %v168 = vld [vmem:[%s4] sm:$0x1]
    %v170 = vperm.slane %v168, 0
    %172 = vmatpush.msra.mxu0 %v167
    %173 = vmatpush.msra.mxu0 %v166
    %174 = vmatpush.msra.mxu0 %v165
    %175 = vmatpush.msra.mxu0 %v164
    %176 = vmatpush.msra.mxu0 %v163
    %177 = vmatpush.msra.mxu0 %v162
    %178 = vmatpush.msra.mxu0 %v161
    %179 = vmatpush.msra.mxu0 %v160
    %180 = vmatpush.msra.mxu0 %v159
    %181 = vmatpush.msra.mxu0 %v158
    %182 = vmatpush.msra.mxu0 %v157
    %183 = vmatpush.msra.mxu0 %v156
    %184 = vmatpush.msra.mxu0 %v155
    %185 = vmatpush.msra.mxu0 %v154
    %186 = vmatpush.msra.mxu0 %v153
    %187 = vmatpush.msra.mxu0 %v152
    %188 = vmatmul.f32.gmra.mxu0 %v150
    %v189 = vpop.f32.mrf.mxu0
    %v190 = vadd.f32 %v170, %v189
    %191 = vmatmul.f32.gmra.mxu0 %v151
    %v192 = vpop.f32.mrf.mxu0
    %v193 = vadd.f32 %v170, %v192
    %194 = vdwg.mxu0
    %v195 = vadd.f32 %v21, %v190
    %v196 = vadd.f32 %v22, %v193
    %197 = vst.msk [vmem:[#allocation2] sm:$0xff] %vm23, %v195
    %198 = vst.msk [vmem:[#allocation2 + $0x8] sm:$0xff] %vm23, %v196
    // Predicated region
    $region22: #{_ffn_forward.1} parent=1 // pred_check
      _
    $region23: #{_ffn_forward.1} parent=1 // pred_check_branch
      %200 = sbr.rel (0) target = $region25
    $region24: #{_ffn_forward.1} parent=1 // pred_region
      %202 = vsyncadd [#allocation3], 0
      %s203 = sshll.u32 [#allocation2], 4
      %s204 = int_to_ptr.vmem [resolvable:$true] %s203
      %s205 = sshll.u32 %s5, 4
      %s206 = int_to_ptr.hbm [resolvable:$true] %s205
      %211 = dma.vmem_to_hbm [thread:$0]  %s204, 256, %s206, [#allocation3], 128, 128, 8
    $region25: #{_ffn_forward.1} parent=1 // pred_fallthru
      _
    // Predicated region
    $region26: #{_ffn_forward.1} parent=1 // pred_check
      _
    $region27: #{_ffn_forward.1} parent=1 // pred_check_branch
      %213 = sbr.rel (0) target = $region29
    $region28: #{_ffn_forward.1} parent=1 // pred_region
      %215 = dma.done [#allocation3], 256
    $region29: #{_ffn_forward.1} parent=1 // pred_fallthru
      _
    %216 = vsyncpa [#allocation3], 1

</llo_original>
